<compile_context>
chip_gen: v5e
topology: v5e:2x2
jax: 0.10.0
libtpu: 0.0.40
codegen_flags: <defaults>
</compile_context>

<pallas_src>
import functools
import math

import jax
import jax.numpy as jnp
from jax.experimental import pallas as pl
from jax.experimental.pallas import tpu as pltpu


# ---------------------------------------------------------------------------
# Kernel: out[r, :] = x[r, :] + pe[r // batch, :]   (rows = seq*batch)
# ---------------------------------------------------------------------------
def _pos_enc_kernel(x_ref, pe_ref, o_ref, *, batch):
    # x_ref: (tR, D)   pe_ref: (tR // batch, D) f32   o_ref: (tR, D)
    pe_blk = pe_ref[...]                                   # (tP, D) float32
    if batch > 1:
        tp, d = pe_blk.shape
        # repeat each pe row `batch` times along the row (sublane) axis;
        # this XLU/relayout work is on 1/B of the data and is hidden behind
        # the HBM stream.
        pe_blk = jnp.broadcast_to(pe_blk[:, None, :], (tp, batch, d))
        pe_blk = pe_blk.reshape(tp * batch, d)
    o_ref[...] = (x_ref[...].astype(jnp.float32) + pe_blk).astype(o_ref.dtype)


# ---------------------------------------------------------------------------
# Row-tile sizing: by BYTES, under a v7x-safe VMEM budget, multiple of 8*batch
# ---------------------------------------------------------------------------
def _pick_row_tile(rows, batch, d, x_itemsize, pe_itemsize=4):
    g = 8 * batch                       # keeps x block rows % 8 == 0 AND pe block rows % 8 == 0
    target_x_bytes = 2 * 1024 * 1024    # ~2 MiB x-block: amortises ~0.35us/step, near HBM roofline
    vmem_budget = 24 * 1024 * 1024      # double-buffered 2*x + 2*out + 2*pe, v7x headroom

    bytes_per_row = d * x_itemsize
    per_row_vmem = 4.0 * d * x_itemsize + 2.0 * d * pe_itemsize / batch

    t = min(max(1, target_x_bytes // bytes_per_row),
            max(1, int(vmem_budget / per_row_vmem)))
    t = max(g, (t // g) * g)            # round down to granularity, at least one granule

    rows_padded = ((rows + g - 1) // g) * g
    t = min(t, rows_padded)

    # v7x megacore / pipelining: prefer >= 2 grid steps when the problem allows.
    if t >= rows_padded and rows_padded >= 2 * g:
        t = ((rows_padded // 2 + g - 1) // g) * g
    return t


# ---------------------------------------------------------------------------
# Wrapper
# ---------------------------------------------------------------------------
def positional_encoding_forward(x, pe, *, donate_x=False):
    """x: (S, B, D); pe: (max_len, D) or (max_len, 1, D), max_len >= S.

    Returns x + pe[:S] broadcast over batch (dropout identity at eval).
    Set donate_x=True only if the caller donates x at the jit boundary
    (otherwise XLA inserts a defensive copy).
    """
    S, B, D = x.shape
    if pe.ndim == 3:                      # accept the torch (max_len, 1, D) buffer layout
        pe = pe.reshape(pe.shape[0], pe.shape[-1])
    max_len, d_pe = pe.shape
    assert d_pe == D and max_len >= S

    rows = S * B
    x_itemsize = jnp.dtype(x.dtype).itemsize
    pe_itemsize = jnp.dtype(pe.dtype).itemsize

    t_rows = _pick_row_tile(rows, B, D, x_itemsize, pe_itemsize)
    t_pe = t_rows // B                    # multiple of 8 by construction
    grid = (pl.cdiv(rows, t_rows),)

    x2 = x.reshape(rows, D)               # free contiguous reshape: rows on sublanes, D on lanes

    # VMEM footprint of the double-buffered pipeline; raise the scoped limit
    # (with headroom) only if the minimum legal tile overshoots the budget.
    footprint = 4 * t_rows * D * x_itemsize + 2 * t_pe * D * pe_itemsize
    cp_kwargs = dict(dimension_semantics=("parallel",))
    if footprint > 24 * 1024 * 1024:
        cp_kwargs["vmem_limit_bytes"] = int(footprint * 1.25) + (1 << 20)

    out2 = pl.pallas_call(
        functools.partial(_pos_enc_kernel, batch=B),
        out_shape=jax.ShapeDtypeStruct((rows, D), x.dtype),
        grid=grid,
        in_specs=[
            pl.BlockSpec((t_rows, D), lambda i: (i, 0)),   # x rows
            pl.BlockSpec((t_pe, D), lambda i: (i, 0)),     # only pe[:~S] is ever DMA'd
        ],
        out_specs=pl.BlockSpec((t_rows, D), lambda i: (i, 0)),
        compiler_params=pltpu.CompilerParams(**cp_kwargs),
        input_output_aliases={0: 0} if donate_x else {},
    )(x2, pe)
    return out2.reshape(S, B, D)


# ---------------------------------------------------------------------------
# "register_buffer" construction (done once, mirrors the torch __init__)
# Kept in float32 like the torch buffer; returned squeezed to (max_len, D).
# ---------------------------------------------------------------------------
def make_positional_encoding_table(d_model, max_len=5000):
    position = jnp.arange(max_len, dtype=jnp.float32)[:, None]             # (max_len, 1)
    div_term = jnp.exp(jnp.arange(0, d_model, 2, dtype=jnp.float32)
                       * (-math.log(10000.0) / d_model))                   # (D/2,)
    pe = jnp.zeros((max_len, d_model), jnp.float32)
    pe = pe.at[:, 0::2].set(jnp.sin(position * div_term))
    pe = pe.at[:, 1::2].set(jnp.cos(position * div_term))
    return pe                                                               # (max_len, D)


# ---------------------------------------------------------------------------
# Pure-JAX reference for validation
# ---------------------------------------------------------------------------
def _ref_forward(x, pe):
    return x + pe[: x.shape[0]][:, None, :]   # dropout identity at eval


if __name__ == "__main__":
    MAX_LEN = 5000
    fwd = jax.jit(positional_encoding_forward)

    # Test 1: the small demo shape (seq=8, batch=2, d_model=32) -> single tile.
    S, B, D = 8, 2, 32
    key = jax.random.PRNGKey(0)
    x = jax.random.normal(key, (S, B, D), jnp.float32)
    pe = make_positional_encoding_table(D, MAX_LEN)
    out = fwd(x, pe)
    jax.block_until_ready(out)
    ref = _ref_forward(x, pe)
    assert out.shape == (S, B, D)
    assert float(jnp.max(jnp.abs(out - ref))) < 1e-6

    # Test 2: odd seq / odd batch -> cdiv grid with a ragged (masked) last tile.
    S2, B2, D2 = 23, 3, 48
    x2 = jax.random.normal(jax.random.PRNGKey(1), (S2, B2, D2), jnp.float32)
    pe2 = make_positional_encoding_table(D2, MAX_LEN)
    out2 = fwd(x2, pe2)
    jax.block_until_ready(out2)
    ref2 = _ref_forward(x2, pe2)
    assert out2.shape == (S2, B2, D2)
    assert float(jnp.max(jnp.abs(out2 - ref2))) < 1e-6

    print("KERNEL_OK")
</pallas_src>

<mosaic_0001>
module attributes {stable_mosaic.version = 11 : i64} {
  func.func @_pos_enc_kernel(%arg0: i32, %arg1: memref<16x32xf32, #tpu.memory_space<vmem>>, %arg2: memref<8x32xf32, #tpu.memory_space<vmem>>, %arg3: memref<16x32xf32, #tpu.memory_space<vmem>>) attributes {dimension_semantics = [#tpu.dimension_semantics<parallel>], iteration_bounds = array<i64: 1>, scalar_prefetch = 0 : i64, scratch_operands = 0 : i64, tpu.core_type = #tpu.core_type<tc>, window_params = [{transform_indices = @transform_0, window_bounds = array<i64: 16, 32>}, {transform_indices = @transform_1, window_bounds = array<i64: 8, 32>}, {transform_indices = @transform_2, window_bounds = array<i64: 16, 32>}]} {
    %c0 = arith.constant 0 : index
    %c0_0 = arith.constant 0 : index
    %0 = vector.load %arg2[%c0, %c0_0] : memref<8x32xf32, #tpu.memory_space<vmem>>, vector<8x32xf32>
    %1 = vector.shape_cast %0 : vector<8x32xf32> to vector<8x1x32xf32>
    %2 = vector.shape_cast %1 : vector<8x1x32xf32> to vector<8x1x32xf32>
    %3 = vector.broadcast %2 : vector<8x1x32xf32> to vector<8x2x32xf32>
    %4 = vector.shape_cast %3 : vector<8x2x32xf32> to vector<16x32xf32>
    %c0_1 = arith.constant 0 : index
    %c0_2 = arith.constant 0 : index
    %5 = vector.load %arg1[%c0_1, %c0_2] : memref<16x32xf32, #tpu.memory_space<vmem>>, vector<16x32xf32>
    %6 = arith.addf %5, %4 : vector<16x32xf32>
    %c0_3 = arith.constant 0 : index
    %c0_4 = arith.constant 0 : index
    %7 = vector.load %arg3[%c0_3, %c0_4] : memref<16x32xf32, #tpu.memory_space<vmem>>, vector<16x32xf32>
    tpu.vector_store %arg3[%c0_3, %c0_4], %6 {strides = array<i32>} : memref<16x32xf32, #tpu.memory_space<vmem>>, vector<16x32xf32>,
    return
  }
  func.func @transform_0(%arg0: i32) -> (i32, i32) {
    %c0_i32 = arith.constant 0 : i32
    %c0_i32_0 = arith.constant 0 : i32
    return %arg0, %c0_i32 : i32, i32
  }
  func.func @transform_1(%arg0: i32) -> (i32, i32) {
    %c0_i32 = arith.constant 0 : i32
    %c0_i32_0 = arith.constant 0 : i32
    return %arg0, %c0_i32 : i32, i32
  }
  func.func @transform_2(%arg0: i32) -> (i32, i32) {
    %c0_i32 = arith.constant 0 : i32
    %c0_i32_0 = arith.constant 0 : i32
    return %arg0, %c0_i32 : i32, i32
  }
}

</mosaic_0001>

<llo_original>
// kernel: positional_encoding_forward.1
$region0: #{positional_encoding_forward.1}
  #allocation0 [shape = 'u32[]', space=smem, size = 0x4, offset = 0x4, fixed_abs, tag = 'smem constant byte address 0x4 - core index']
  #allocation1 [shape = 'u32[72,128]{1,0:T(1,128)}', space=vmem, size = 0x9000, scoped, tag = 'internal scratch']
  %s0 = inlined_call_operand.vmem [shape: f32[16,32], index: 0, kind: input, shape index: {}]
  %s1 = inlined_call_operand.vmem [shape: f32[5000,32], index: 1, kind: input, shape index: {}]
  %s2 = inlined_call_operand.hbm [shape: f32[16,32], index: 2, kind: output, shape index: {}]
  %s3 = sld [smem:[#allocation0]]
  $region18: #{positional_encoding_forward.1} parent=0
    _
  %s5 = ssub.s32 1, %s3
  %s6 = scalar_select 0, %s5, %s3
  $region1: #{positional_encoding_forward.1} parent=0
    #allocation2 [shape = 'u8[8192]{0}', space=vmem, size = 0x2000, scoped, tag = 'output window, operand 0, single buffered']
    #allocation3 [shape = 's32[1]{0}', space=sflag, size = 0x4, scoped, tag = 'scoped memory for positional_encoding_forward.1']
    %7 = vsyncpa [#allocation3], 0
    // Predicated region
    $region2: #{positional_encoding_forward.1} parent=1 // pred_check
      _
    $region3: #{positional_encoding_forward.1} parent=1 // pred_check_branch
      %9 = sbr.rel (0) target = $region5
    $region4: #{positional_encoding_forward.1} parent=1 // pred_region
      _
    $region5: #{positional_encoding_forward.1} parent=1 // pred_fallthru
      _
    // Predicated region
    $region6: #{positional_encoding_forward.1} parent=1 // pred_check
      _
    $region7: #{positional_encoding_forward.1} parent=1 // pred_check_branch
      %11 = sbr.rel (0) target = $region9
    $region8: #{positional_encoding_forward.1} parent=1 // pred_region
      _
    $region9: #{positional_encoding_forward.1} parent=1 // pred_fallthru
      _
    %v12 = vld [vmem:[%s1] sm:$0xff]
    %v14 = vrot.slane %v12, 1
    %v15 = vrot.slane %v12, 2
    %v16 = vrot.slane %v12, 3
    %v17 = vrot.slane %v12, 4
    %v18 = vrot.slane %v12, 5
    %v19 = vrot.slane %v12, 6
    %v20 = vrot.slane %v12, 7
    %v21 = vperm.slane %v12, 0
    %v22 = vperm.slane %v14, 0
    %v23 = vperm.slane %v15, 0
    %v24 = vperm.slane %v16, 0
    %v25 = vperm.slane %v17, 0
    %v26 = vperm.slane %v18, 0
    %v27 = vperm.slane %v19, 0
    %v28 = vperm.slane %v20, 0
    %v29 = vld [vmem:[%s0] sm:$0xff]
    %v30 = vld [vmem:[%s0 + $0x8] sm:$0xff]
    %31 = vst [vmem:[#allocation1] ss:$4 sm:$0xff] %v21
    %s32 = scalar_lea.vmem [#allocation1], 1
    %33 = vst [vmem:[%s32] ss:$4 sm:$0xff] %v22
    %s34 = scalar_lea.vmem [#allocation1], 2
    %35 = vst [vmem:[%s34] ss:$4 sm:$0xff] %v23
    %s36 = scalar_lea.vmem [#allocation1], 3
    %37 = vst [vmem:[%s36] ss:$4 sm:$0xff] %v24
    %s38 = scalar_lea.vmem [#allocation1], 32
    %39 = vst [vmem:[%s38] ss:$4 sm:$0xff] %v25
    %s40 = scalar_lea.vmem [#allocation1], 33
    %41 = vst [vmem:[%s40] ss:$4 sm:$0xff] %v26
    %s42 = scalar_lea.vmem [#allocation1], 34
    %43 = vst [vmem:[%s42] ss:$4 sm:$0xff] %v27
    %s44 = scalar_lea.vmem [#allocation1], 35
    %45 = vst [vmem:[%s44] ss:$4 sm:$0xff] %v28
    %v46 = vld.sshfl [vmem:[#allocation1] sm:$0xff pattern:$0x73625140]
    %v47 = vld.sshfl [vmem:[#allocation1 + $0x20] sm:$0xff pattern:$0x73625140]
    %v50 = vadd.f32 %v29, %v46
    %v51 = vadd.f32 %v30, %v47
    %vm52 = vcmask 261120
    %53 = vst.msk [vmem:[#allocation2] sm:$0xff] %vm52, %v50
    %54 = vst.msk [vmem:[#allocation2 + $0x8] sm:$0xff] %vm52, %v51
    // Predicated region
    $region10: #{positional_encoding_forward.1} parent=1 // pred_check
      _
    $region11: #{positional_encoding_forward.1} parent=1 // pred_check_branch
      %56 = sbr.rel (0) target = $region13
    $region12: #{positional_encoding_forward.1} parent=1 // pred_region
      %58 = vsyncadd [#allocation3], 0
      %s59 = sshll.u32 [#allocation2], 4
      %s60 = int_to_ptr.vmem [resolvable:$true] %s59
      %s61 = sshll.u32 %s2, 4
      %s62 = int_to_ptr.hbm [resolvable:$true] %s61
      %67 = dma.vmem_to_hbm [thread:$0]  %s60, 256, %s62, [#allocation3], 128, 128, 8
    $region13: #{positional_encoding_forward.1} parent=1 // pred_fallthru
      _
    // Predicated region
    $region14: #{positional_encoding_forward.1} parent=1 // pred_check
      _
    $region15: #{positional_encoding_forward.1} parent=1 // pred_check_branch
      %69 = sbr.rel (0) target = $region17
    $region16: #{positional_encoding_forward.1} parent=1 // pred_region
      %71 = dma.done [#allocation3], 256
    $region17: #{positional_encoding_forward.1} parent=1 // pred_fallthru
      _
    %72 = vsyncpa [#allocation3], 1

</llo_original>
